<compile_context>
chip_gen: v7x
topology: tpu7x:2x2x1
jax: 0.10.0
libtpu: 0.0.40
codegen_flags: <defaults>
</compile_context>

<pallas_src>
import math

import jax
import jax.numpy as jnp
from jax.experimental import pallas as pl
from jax.experimental.pallas import tpu as pltpu

LANE = 128      # keep the feature (last) dim a multiple of this (lane-dense stores)
SUBLANE = 8     # keep batch tiles a multiple of this


def _round_up(n, m):
    return ((n + m - 1) // m) * m


def devlayer_kernel(x_ref, wt_ref, shift_ref, o_ref):
    # MXU matmul with f32 accumulation, then fused BN/bias shift + ReLU (VPU).
    y = jnp.dot(x_ref[...], wt_ref[...], preferred_element_type=jnp.float32)
    o_ref[...] = jnp.maximum(y + shift_ref[...], 0.0).astype(o_ref.dtype)


def fold_devlayer_params(weight, bias, gamma, beta, running_mean, running_var,
                         eps=1e-5, *, mxu_dtype=jnp.bfloat16):
    """One-time (weight-load-time) constant transform of the inference params.

    Folds Linear bias + BatchNorm1d eval affine into the weight and a single
    per-channel shift, and zero-pads the output-feature dim to a multiple of
    128 so the kernel's stores are lane-dense.
    """
    out_f, in_f = weight.shape
    scale = gamma / jnp.sqrt(running_var + eps)                 # (OUT,)
    wt_fused = weight.T * scale[None, :]                        # (IN, OUT)
    shift = (bias - running_mean) * scale + beta                # (OUT,)

    out_pad = _round_up(out_f, LANE)
    wt_fused = jnp.pad(wt_fused, ((0, 0), (0, out_pad - out_f)))
    shift = jnp.pad(shift, (0, out_pad - out_f))
    return (wt_fused.astype(mxu_dtype),
            shift.reshape(1, out_pad).astype(jnp.float32))


def _pick_block_b(b, in_f, out_pad, itemsize,
                  vmem_budget=48 * 1024 * 1024, max_rows=512):
    """Largest batch tile (multiple of 8, <= max_rows) fitting the VMEM budget."""
    b_pad8 = _round_up(b, SUBLANE)
    # Resident VMEM: 2x weight + 2x shift (pipeline double-buffers inputs even
    # when their block index is constant) + 2x x-tile + 2x out-tile (f32).
    fixed = 2 * in_f * out_pad * itemsize + 2 * out_pad * 4
    per_row = 2 * in_f * itemsize + 2 * out_pad * 4
    cap = max(SUBLANE, (vmem_budget - fixed) // per_row)
    blk = min(b_pad8, max_rows, cap)
    if b_pad8 >= 2 * SUBLANE:
        # Keep >= 2 grid steps so both v7x TensorCores get work ("parallel" axis).
        blk = min(blk, _round_up(b_pad8 // 2, SUBLANE))
    return max(SUBLANE, (blk // SUBLANE) * SUBLANE)


def devlayer_forward(x, wt_fused, shift, out_features, *, mxu_dtype=jnp.bfloat16):
    """x: (B, IN) float32.  wt_fused: (IN, OUT_pad).  shift: (1, OUT_pad) f32."""
    b, in_f = x.shape
    in_f2, out_pad = wt_fused.shape
    assert in_f == in_f2 and out_pad % LANE == 0

    x = x.astype(mxu_dtype)
    itemsize = x.dtype.itemsize

    block_b = _pick_block_b(b, in_f, out_pad, itemsize)
    b_pad = _round_up(b, block_b)
    if b_pad != b:
        x = jnp.pad(x, ((0, b_pad - b), (0, 0)))
    grid = (b_pad // block_b,)

    # Explicit VMEM budget (also sized for v7x's 64 MiB VMEM).
    vmem_needed = (2 * in_f * out_pad * itemsize + 2 * out_pad * 4
                   + 2 * block_b * in_f * itemsize + 2 * block_b * out_pad * 4)
    vmem_limit = int(min(max(vmem_needed + (1 << 20), 32 * 1024 * 1024),
                         48 * 1024 * 1024))

    cost = pl.CostEstimate(
        flops=2 * b_pad * in_f * out_pad,
        transcendentals=0,
        bytes_accessed=(b_pad * in_f * itemsize            # x
                        + in_f * out_pad * itemsize        # fused weight
                        + out_pad * 4                      # shift
                        + b_pad * out_pad * 4))            # output

    out = pl.pallas_call(
        devlayer_kernel,
        out_shape=jax.ShapeDtypeStruct((b_pad, out_pad), jnp.float32),
        grid_spec=pltpu.PrefetchScalarGridSpec(
            num_scalar_prefetch=0,
            grid=grid,
            in_specs=[
                pl.BlockSpec((block_b, in_f), lambda i: (i, 0)),   # x tile
                pl.BlockSpec((in_f, out_pad), lambda i: (0, 0)),   # fused W^T (constant)
                pl.BlockSpec((1, out_pad), lambda i: (0, 0)),      # fused shift (constant)
            ],
            out_specs=pl.BlockSpec((block_b, out_pad), lambda i: (i, 0)),
        ),
        compiler_params=pltpu.CompilerParams(
            dimension_semantics=("parallel",),
            vmem_limit_bytes=vmem_limit),
        cost_estimate=cost,
    )(x, wt_fused, shift)

    return out[:b, :out_features]


def _xavier_uniform(key, out_size, in_size):
    # Matches torch.nn.init.xavier_uniform_ (gain=1).
    a = math.sqrt(6.0 / (in_size + out_size))
    return jax.random.uniform(key, (out_size, in_size), jnp.float32, -a, a)


if __name__ == "__main__":
    key = jax.random.PRNGKey(0)
    k_x, k_w = jax.random.split(key)

    B, IN, OUT = 8, 32, 64  # small shapes consistent with DevLayer(IN, OUT)

    x = jax.random.normal(k_x, (B, IN), jnp.float32)

    # Deterministic parameter init mirroring DevLayer.__init__ / init_weights.
    weight = _xavier_uniform(k_w, OUT, IN)          # linear.weight (OUT, IN)
    bias = jnp.zeros((OUT,), jnp.float32)           # linear.bias = 0
    gamma = jnp.ones((OUT,), jnp.float32)           # batchnorm.weight
    beta = jnp.zeros((OUT,), jnp.float32)           # batchnorm.bias
    running_mean = jnp.zeros((OUT,), jnp.float32)
    running_var = jnp.ones((OUT,), jnp.float32)
    eps = 1e-5

    # One-time constant fold of Linear bias + BN(eval) affine into the weight.
    wt_fused, shift = fold_devlayer_params(
        weight, bias, gamma, beta, running_mean, running_var, eps)

    out = devlayer_forward(x, wt_fused, shift, OUT)
    out = jax.block_until_ready(out)
    assert out.shape == (B, OUT)

    # Reference 1: same bf16 input rounding / f32 accumulation as the kernel.
    xq = x.astype(jnp.bfloat16).astype(jnp.float32)
    wq = wt_fused[:, :OUT].astype(jnp.float32)
    ref_q = jnp.maximum(xq @ wq + shift[0, :OUT], 0.0)
    assert jnp.allclose(out, ref_q, atol=2e-3, rtol=2e-3), \
        float(jnp.max(jnp.abs(out - ref_q)))

    # Reference 2: eval-mode PyTorch semantics in pure f32 (looser tolerance
    # for the bf16 MXU inputs).
    ref_f32 = (x @ weight.T + bias - running_mean) / jnp.sqrt(running_var + eps)
    ref_f32 = jnp.maximum(ref_f32 * gamma + beta, 0.0)  # dropout = identity (eval)
    assert jnp.allclose(out, ref_f32, atol=5e-2, rtol=5e-2)

    print("KERNEL_OK")
</pallas_src>

<mosaic_0001>
module attributes {stable_mosaic.version = 11 : i64} {
  func.func @devlayer_kernel(%arg0: i32, %arg1: memref<8x32xbf16, #tpu.memory_space<vmem>>, %arg2: memref<32x128xbf16, #tpu.memory_space<vmem>>, %arg3: memref<1x128xf32, #tpu.memory_space<vmem>>, %arg4: memref<8x128xf32, #tpu.memory_space<vmem>>) attributes {dimension_semantics = [#tpu.dimension_semantics<parallel>], iteration_bounds = array<i64: 1>, scalar_prefetch = 0 : i64, scratch_operands = 0 : i64, tpu.core_type = #tpu.core_type<tc>, window_params = [{transform_indices = @transform_0, window_bounds = array<i64: 8, 32>}, {pipeline_mode = #tpu.pipeline_mode<synchronous>, transform_indices = @transform_1, window_bounds = array<i64: 32, 128>}, {pipeline_mode = #tpu.pipeline_mode<synchronous>, transform_indices = @transform_2, window_bounds = array<i64: 1, 128>}, {transform_indices = @transform_3, window_bounds = array<i64: 8, 128>}]} {
    %c0 = arith.constant 0 : index
    %c0_0 = arith.constant 0 : index
    %0 = vector.load %arg1[%c0, %c0_0] : memref<8x32xbf16, #tpu.memory_space<vmem>>, vector<8x32xbf16>
    %c0_1 = arith.constant 0 : index
    %c0_2 = arith.constant 0 : index
    %1 = vector.load %arg2[%c0_1, %c0_2] : memref<32x128xbf16, #tpu.memory_space<vmem>>, vector<32x128xbf16>
    %cst = arith.constant dense<0.000000e+00> : vector<8x128xf32>
    %2 = tpu.matmul %0, %1, %cst {dimension_numbers = #tpu.dot_dimension_numbers<[1], [0], [0], [1], [0, 0, 1, 1], [], []>} : vector<8x32xbf16>, vector<32x128xbf16>, vector<8x128xf32> -> vector<8x128xf32>
    %c0_3 = arith.constant 0 : index
    %c0_4 = arith.constant 0 : index
    %3 = vector.load %arg3[%c0_3, %c0_4] : memref<1x128xf32, #tpu.memory_space<vmem>>, vector<1x128xf32>
    %4 = vector.broadcast %3 : vector<1x128xf32> to vector<8x128xf32>
    %5 = arith.addf %2, %4 : vector<8x128xf32>
    %cst_5 = arith.constant 0.000000e+00 : f32
    %6 = vector.broadcast %cst_5 : f32 to vector<8x128xf32>
    %7 = arith.maximumf %5, %6 : vector<8x128xf32>
    %c0_6 = arith.constant 0 : index
    %c0_7 = arith.constant 0 : index
    %8 = vector.load %arg4[%c0_6, %c0_7] : memref<8x128xf32, #tpu.memory_space<vmem>>, vector<8x128xf32>
    tpu.vector_store %arg4[%c0_6, %c0_7], %7 {strides = array<i32>} : memref<8x128xf32, #tpu.memory_space<vmem>>, vector<8x128xf32>,
    return
  }
  func.func @transform_0(%arg0: i32) -> (i32, i32) {
    %c0_i32 = arith.constant 0 : i32
    %c0_i32_0 = arith.constant 0 : i32
    return %arg0, %c0_i32 : i32, i32
  }
  func.func @transform_1(%arg0: i32) -> (i32, i32) {
    %c0_i32 = arith.constant 0 : i32
    %c0_i32_0 = arith.constant 0 : i32
    %c0_i32_1 = arith.constant 0 : i32
    return %c0_i32, %c0_i32_0 : i32, i32
  }
  func.func @transform_2(%arg0: i32) -> (i32, i32) {
    %c0_i32 = arith.constant 0 : i32
    %c0_i32_0 = arith.constant 0 : i32
    %c0_i32_1 = arith.constant 0 : i32
    return %c0_i32, %c0_i32_0 : i32, i32
  }
  func.func @transform_3(%arg0: i32) -> (i32, i32) {
    %c0_i32 = arith.constant 0 : i32
    %c0_i32_0 = arith.constant 0 : i32
    return %arg0, %c0_i32 : i32, i32
  }
}

</mosaic_0001>

<llo_original>
// kernel: tpu_custom_call.1
$region0: #{tpu_custom_call.1}
  #allocation0 [shape = 'u32[]', space=smem, size = 0x4, offset = 0x4, fixed_abs, tag = 'smem constant byte address 0x4 - core index']
  #allocation1 [shape = 'u32[144,128]{1,0:T(1,128)}', space=vmem, size = 0x12000, scoped, tag = 'internal scratch']
  %s0 = inlined_call_operand.hbm [shape: bf16[8,32], index: 0, kind: input, shape index: {}]
  %s1 = inlined_call_operand.hbm [shape: bf16[32,128], index: 1, kind: input, shape index: {}]
  %s2 = inlined_call_operand.vmem [shape: f32[1,128], index: 2, kind: input, shape index: {}]
  %s3 = inlined_call_operand.hbm [shape: f32[8,128], index: 3, kind: output, shape index: {}]
  %s4 = sld [smem:[#allocation0]]
  $region30: #{tpu_custom_call.1} parent=0
    _
  %s6 = ssub.s32 1, %s4
  %s7 = scalar_select 0, %s6, %s4
  $region1: #{tpu_custom_call.1} parent=0
    #allocation2 [shape = 'u8[2048]{0}', space=vmem, size = 0x800, scoped, tag = 'input window, operand 0, single buffered']
    #allocation3 [shape = 's32[1]{0}', space=sflag, size = 0x4, scoped, tag = 'scoped memory for tpu_custom_call.1']
    #allocation4 [shape = 's32[1]{0}', space=sflag, size = 0x4, scoped, tag = 'scoped memory for tpu_custom_call.1']
    #allocation5 [shape = 'u8[8192]{0}', space=vmem, size = 0x2000, scoped, tag = 'input window, operand 1, single buffered']
    #allocation6 [shape = 's32[1]{0}', space=sflag, size = 0x4, scoped, tag = 'scoped memory for tpu_custom_call.1']
    #allocation7 [shape = 'u8[4096]{0}', space=vmem, size = 0x1000, scoped, tag = 'output window, operand 0, single buffered']
    %8 = vsyncpa [#allocation3], 0
    %9 = vsyncpa [#allocation6], 0
    %10 = vsyncpa [#allocation4], 0
    // Predicated region
    $region2: #{tpu_custom_call.1} parent=1 // pred_check
      _
    $region3: #{tpu_custom_call.1} parent=1 // pred_check_branch
      %12 = sbr.rel (0) target = $region5
    $region4: #{tpu_custom_call.1} parent=1 // pred_region
      %s14 = ssub.s32 64, 64
      %15 = vsyncadd [#allocation3], %s14
      %s17 = sshll.u32 [#allocation2], 4
      %s18 = int_to_ptr.vmem [resolvable:$true] %s17
      %20 = dma.hbm_to_vmem [thread:$0]  %s0, 64, %s18, [#allocation3]
    $region5: #{tpu_custom_call.1} parent=1 // pred_fallthru
      _
    // Predicated region
    $region6: #{tpu_custom_call.1} parent=1 // pred_check
      _
    $region7: #{tpu_custom_call.1} parent=1 // pred_check_branch
      %22 = sbr.rel (0) target = $region9
    $region8: #{tpu_custom_call.1} parent=1 // pred_region
      %s24 = ssub.s32 256, 256
      %25 = vsyncadd [#allocation6], %s24
      %s26 = sshll.u32 [#allocation5], 4
      %s27 = int_to_ptr.vmem [resolvable:$true] %s26
      %32 = dma.hbm_to_vmem [thread:$0]  %s1, 256, %s27, [#allocation6], 64, 64, 4
    $region9: #{tpu_custom_call.1} parent=1 // pred_fallthru
      _
    // Predicated region
    $region10: #{tpu_custom_call.1} parent=1 // pred_check
      _
    $region11: #{tpu_custom_call.1} parent=1 // pred_check_branch
      %34 = sbr.rel (0) target = $region13
    $region12: #{tpu_custom_call.1} parent=1 // pred_region
      _
    $region13: #{tpu_custom_call.1} parent=1 // pred_fallthru
      _
    // Predicated region
    $region14: #{tpu_custom_call.1} parent=1 // pred_check
      _
    $region15: #{tpu_custom_call.1} parent=1 // pred_check_branch
      %36 = sbr.rel (0) target = $region17
    $region16: #{tpu_custom_call.1} parent=1 // pred_region
      %37 = dma.done [#allocation3], 64
    $region17: #{tpu_custom_call.1} parent=1 // pred_fallthru
      _
    // Predicated region
    $region18: #{tpu_custom_call.1} parent=1 // pred_check
      _
    $region19: #{tpu_custom_call.1} parent=1 // pred_check_branch
      %39 = sbr.rel (0) target = $region21
    $region20: #{tpu_custom_call.1} parent=1 // pred_region
      %40 = dma.done [#allocation6], 256
    $region21: #{tpu_custom_call.1} parent=1 // pred_fallthru
      _
    %v42 = vld [vmem:[#allocation2] sm:$0xf]
    %v43 = vld [vmem:[#allocation5] sm:$0xf]
    %v44 = vld [vmem:[#allocation5 + $0x4] sm:$0xf]
    %v45 = vld [vmem:[#allocation5 + $0x8] sm:$0xf]
    %v46 = vld [vmem:[#allocation5 + $0xc] sm:$0xf]
    %v47 = vld [vmem:[%s2] sm:$0x1]
    %v49 = vlaneseq
    %v50 = vshrl.u32 %v49, 7
    %v51 = vsub.s32 0, %v50
    %v52 = vrot.slane %v47, %v51
    %v58 = vunpack.c.l.b16 %v43
    %v59 = vunpack.c.l.b16 %v44
    %v60 = vunpack.c.l.b16 %v45
    %v61 = vunpack.c.l.b16 %v46
    %v62 = vpack.c.b16 %v59, %v58
    %v63 = vpack.c.b16 %v61, %v60
    %vm66 = vcmask 261120
    %v68 = vsel %vm66, %v42, 0
    %70 = vmatprep.subr.bf16.mxu0 0
    %71 = vmatpush1.bf16.msra.mxu0 %v62
    %72 = vmatprep.subr.bf16.mxu0 0
    %73 = vmatpush1.bf16.msra.mxu0 %v63
    %74 = vmatprep.subr.bf16.mxu0 0
    %75 = vmatpush1.bf16.msra.mxu0 0
    %76 = vmatprep.subr.bf16.mxu0 0
    %77 = vmatpush1.bf16.msra.mxu0 0
    %78 = vmatprep.subr.bf16.mxu0 0
    %79 = vmatpush1.bf16.msra.mxu0 0
    %80 = vmatprep.subr.bf16.mxu0 0
    %81 = vmatpush1.bf16.msra.mxu0 0
    %82 = vmatprep.subr.bf16.mxu0 0
    %83 = vmatpush1.bf16.msra.mxu0 0
    %84 = vmatprep.subr.bf16.mxu0 0
    %85 = vmatpush1.bf16.msra.mxu0 0
    %86 = vmatprep.subr.bf16.mxu0 0
    %87 = vmatpush1.bf16.msra.mxu0 0
    %88 = vmatprep.subr.bf16.mxu0 0
    %89 = vmatpush1.bf16.msra.mxu0 0
    %90 = vmatprep.subr.bf16.mxu0 0
    %91 = vmatpush1.bf16.msra.mxu0 0
    %92 = vmatprep.subr.bf16.mxu0 0
    %93 = vmatpush1.bf16.msra.mxu0 0
    %94 = vmatprep.subr.bf16.mxu0 0
    %95 = vmatpush1.bf16.msra.mxu0 0
    %96 = vmatprep.subr.bf16.mxu0 0
    %97 = vmatpush1.bf16.msra.mxu0 0
    %98 = vmatprep.subr.bf16.mxu0 0
    %99 = vmatpush1.bf16.msra.mxu0 0
    %100 = vmatprep.subr.bf16.mxu0 0
    %101 = vmatpush1.bf16.msra.mxu0 0
    %102 = vmatprep.mubr.bf16.mxu0 0
    %103 = vmatmul.mubr.bf16.gmra.mrb[0].mxu0 %v68
    %v104 = vpop.f32.mrb[0].mxu0
    %v105 = vadd.f32 %v52, %v104
    %v106 = vpop.f32.mrb[0].mxu0
    %v107 = vpop.f32.mrb[0].mxu0
    %v108 = vpop.f32.mrb[0].mxu0
    %109 = vdwg.mxu0
    %v110 = vmax.f32 %v105, 0.0
    %111 = vst [vmem:[#allocation7] sm:$0xff] %v110
    // Predicated region
    $region22: #{tpu_custom_call.1} parent=1 // pred_check
      _
    $region23: #{tpu_custom_call.1} parent=1 // pred_check_branch
      %113 = sbr.rel (0) target = $region25
    $region24: #{tpu_custom_call.1} parent=1 // pred_region
      %s115 = ssub.s32 128, 128
      %116 = vsyncadd [#allocation4], %s115
      %s118 = sshll.u32 [#allocation7], 4
      %s119 = int_to_ptr.vmem [resolvable:$true] %s118
      %121 = dma.vmem_to_hbm [thread:$0]  %s119, 128, %s3, [#allocation4]
    $region25: #{tpu_custom_call.1} parent=1 // pred_fallthru
      _
    // Predicated region
    $region26: #{tpu_custom_call.1} parent=1 // pred_check
      _
    $region27: #{tpu_custom_call.1} parent=1 // pred_check_branch
      %123 = sbr.rel (0) target = $region29
    $region28: #{tpu_custom_call.1} parent=1 // pred_region
      %124 = dma.done [#allocation4], 128
    $region29: #{tpu_custom_call.1} parent=1 // pred_fallthru
      _
    %125 = vsyncpa [#allocation3], 1
    %126 = vsyncpa [#allocation6], 1
    %127 = vsyncpa [#allocation4], 1

</llo_original>
